<compile_context>
chip_gen: v7x
topology: tpu7x:2x2x1
jax: 0.10.0
libtpu: 0.0.40
codegen_flags: <defaults>
</compile_context>

<pallas_src>
import jax
import jax.numpy as jnp
from jax.experimental import pallas as pl
from jax.experimental.pallas import tpu as pltpu


def _additive_attention_kernel(cand_ref, w_ref, b_ref, q_ref, out_ref):
    # cand_ref: (TB, S, D)  candidates for TB batch rows (f32 or bf16)
    # w_ref:    (D, Q)      linear weight, already transposed to [in, out]
    # b_ref:    (1, Q)      linear bias (f32)
    # q_ref:    (Q, 1)      attention query vector as a column (f32)
    # out_ref:  (TB, D)     attended output rows (f32)
    tb, s, d = cand_ref.shape

    cand = cand_ref[...]                       # (TB, S, D)
    cand2d = cand.reshape(tb * s, d)           # (TB*S, D) -- one big MXU tile

    # Linear + tanh: single [TB*S, D] @ [D, Q] matmul, f32 accumulation.
    temp = jnp.tanh(
        jnp.dot(cand2d, w_ref[...], preferred_element_type=jnp.float32)
        + b_ref[...]
    )                                          # (TB*S, Q) f32

    # Attention scores on the MXU, re-laid out lane-dense as (TB, S).
    scores = jnp.dot(temp, q_ref[...], preferred_element_type=jnp.float32)
    scores = scores.reshape(tb, s)             # (TB, S), S on the lane axis

    # Softmax over the candidate axis: lane-axis max/sum reductions.
    m = jnp.max(scores, axis=-1, keepdims=True)      # (TB, 1)
    e = jnp.exp(scores - m)                          # (TB, S)
    denom = jnp.sum(e, axis=-1, keepdims=True)       # (TB, 1)

    # Unnormalized weighted sum of candidates as a batched MXU contraction;
    # normalization folded in afterwards via the (otherwise idle) EUP slot.
    e3 = e[:, None, :].astype(cand.dtype)            # (TB, 1, S)
    acc = jnp.einsum("bqs,bsd->bqd", e3, cand,
                     preferred_element_type=jnp.float32)    # (TB, 1, D)
    out = acc[:, 0, :] * pl.reciprocal(denom, approx=True)  # (TB, D)
    out_ref[...] = out.astype(out_ref.dtype)


def _pick_batch_tile(batch, seq, dim, itemsize):
    """How many batch rows each grid step processes."""
    # Enough rows to fill the MXU M dimension and amortize per-step overhead.
    target_rows = 1024
    tb = max(1, target_rows // max(seq, 1))
    # Keep the double-buffered candidate block well inside scoped VMEM on all
    # generations (v7x: 32 MiB scoped / 64 MiB physical is the tightest).
    input_budget_bytes = 8 * 1024 * 1024
    tb = min(tb, max(1, input_budget_bytes // (2 * seq * dim * itemsize)))
    if batch >= 16:
        # Keep at least two parallel grid steps so both v7x TensorCores work.
        tb = min(tb, max(8, (pl.cdiv(batch, 2) // 8) * 8))
    if tb >= batch:
        return batch  # single step: a full-extent output block is always legal
    # Multi-step grid: the (TB, D) output block's sublane dim must be 8-aligned.
    return max(8, (tb // 8) * 8)


def additive_attention(candidate_vector, linear_weight, linear_bias,
                       query_vector, *, mxu_dtype=jnp.float32):
    """candidate_vector: [B, S, D]
       linear_weight:    [Q, D]   (PyTorch nn.Linear: out_features x in_features)
       linear_bias:      [Q]
       query_vector:     [Q]
       mxu_dtype:        dtype fed to the MXU for candidates / weight
                         (jnp.bfloat16 halves HBM traffic; math stays f32)
       returns:          [B, D] float32
    """
    B, S, D = candidate_vector.shape
    Q = query_vector.shape[0]

    cand = jnp.asarray(candidate_vector, mxu_dtype)
    w_t = jnp.asarray(linear_weight, jnp.float32).T.astype(mxu_dtype)   # [D, Q]
    b = jnp.asarray(linear_bias, jnp.float32).reshape(1, Q)
    q = jnp.asarray(query_vector, jnp.float32).reshape(Q, 1)

    tb = _pick_batch_tile(B, S, D, jnp.dtype(mxu_dtype).itemsize)
    n_steps = pl.cdiv(B, tb)
    b_pad = n_steps * tb
    if b_pad != B:
        # Zero padding is safe: padded rows produce finite garbage (softmax of
        # constant scores, weighted sum of zeros) that is sliced off below.
        cand = jnp.pad(cand, ((0, b_pad - B), (0, 0), (0, 0)))

    out = pl.pallas_call(
        _additive_attention_kernel,
        out_shape=jax.ShapeDtypeStruct((b_pad, D), jnp.float32),
        grid_spec=pltpu.PrefetchScalarGridSpec(
            num_scalar_prefetch=0,
            grid=(n_steps,),
            in_specs=[
                pl.BlockSpec((tb, S, D), lambda i: (i, 0, 0)),
                pl.BlockSpec((D, Q), lambda i: (0, 0)),
                pl.BlockSpec((1, Q), lambda i: (0, 0)),
                pl.BlockSpec((Q, 1), lambda i: (0, 0)),
            ],
            out_specs=pl.BlockSpec((tb, D), lambda i: (i, 0)),
        ),
        compiler_params=pltpu.CompilerParams(
            dimension_semantics=("parallel",),
            vmem_limit_bytes=32 * 1024 * 1024,
        ),
    )(cand, w_t, b, q)

    return out[:B]


def additive_attention_ref(candidate_vector, linear_weight, linear_bias,
                           query_vector):
    temp = jnp.tanh(
        jnp.einsum("bsd,qd->bsq", candidate_vector, linear_weight) + linear_bias)
    scores = jnp.einsum("bsq,q->bs", temp, query_vector)
    weights = jax.nn.softmax(scores, axis=1)
    return jnp.einsum("bs,bsd->bd", weights, candidate_vector)


if __name__ == "__main__":
    batch_size = 2
    candidate_size = 8          # S
    candidate_vector_dim = 32   # D
    query_vector_dim = 16       # Q

    key = jax.random.PRNGKey(0)
    k_cand, k_w, k_b, k_q, k_big = jax.random.split(key, 5)

    candidate_vector = jax.random.normal(
        k_cand, (batch_size, candidate_size, candidate_vector_dim), jnp.float32)

    bound = 1.0 / (candidate_vector_dim ** 0.5)
    linear_weight = jax.random.uniform(
        k_w, (query_vector_dim, candidate_vector_dim), jnp.float32,
        minval=-bound, maxval=bound)
    linear_bias = jax.random.uniform(
        k_b, (query_vector_dim,), jnp.float32, minval=-bound, maxval=bound)
    attention_query_vector = jax.random.uniform(
        k_q, (query_vector_dim,), jnp.float32, minval=-0.1, maxval=0.1)

    # --- f32 path, small batch (single grid step) ---
    out = additive_attention(candidate_vector, linear_weight, linear_bias,
                             attention_query_vector)
    out = jax.block_until_ready(out)
    ref = additive_attention_ref(candidate_vector, linear_weight, linear_bias,
                                 attention_query_vector)
    assert out.shape == (batch_size, candidate_vector_dim)
    # approx EUP reciprocal in the softmax normalization loosens this slightly
    assert jnp.allclose(out, ref, atol=2e-3, rtol=2e-3)

    # --- f32 path, larger batch (multi-step grid with batch padding) ---
    big_batch = 20
    big_cand = jax.random.normal(
        k_big, (big_batch, candidate_size, candidate_vector_dim), jnp.float32)
    out_big = additive_attention(big_cand, linear_weight, linear_bias,
                                 attention_query_vector)
    out_big = jax.block_until_ready(out_big)
    ref_big = additive_attention_ref(big_cand, linear_weight, linear_bias,
                                     attention_query_vector)
    assert out_big.shape == (big_batch, candidate_vector_dim)
    assert jnp.allclose(out_big, ref_big, atol=2e-3, rtol=2e-3)

    # --- bf16 MXU path (halved HBM traffic; softmax/accumulation stay f32) ---
    out_bf16 = additive_attention(candidate_vector, linear_weight, linear_bias,
                                  attention_query_vector,
                                  mxu_dtype=jnp.bfloat16)
    out_bf16 = jax.block_until_ready(out_bf16)
    assert jnp.allclose(out_bf16, ref, atol=6e-2, rtol=6e-2)

    print("KERNEL_OK")
</pallas_src>

<mosaic_0001>
module attributes {stable_mosaic.version = 11 : i64} {
  func.func @_additive_attention_kernel(%arg0: i32, %arg1: memref<2x8x32xf32, #tpu.memory_space<vmem>>, %arg2: memref<32x16xf32, #tpu.memory_space<vmem>>, %arg3: memref<1x16xf32, #tpu.memory_space<vmem>>, %arg4: memref<16x1xf32, #tpu.memory_space<vmem>>, %arg5: memref<2x32xf32, #tpu.memory_space<vmem>>) attributes {dimension_semantics = [#tpu.dimension_semantics<parallel>], iteration_bounds = array<i64: 1>, scalar_prefetch = 0 : i64, scratch_operands = 0 : i64, tpu.core_type = #tpu.core_type<tc>, window_params = [{transform_indices = @transform_0, window_bounds = array<i64: 2, 8, 32>}, {pipeline_mode = #tpu.pipeline_mode<synchronous>, transform_indices = @transform_1, window_bounds = array<i64: 32, 16>}, {pipeline_mode = #tpu.pipeline_mode<synchronous>, transform_indices = @transform_2, window_bounds = array<i64: 1, 16>}, {pipeline_mode = #tpu.pipeline_mode<synchronous>, transform_indices = @transform_3, window_bounds = array<i64: 16, 1>}, {transform_indices = @transform_4, window_bounds = array<i64: 2, 32>}]} {
    %c0 = arith.constant 0 : index
    %c0_0 = arith.constant 0 : index
    %c0_1 = arith.constant 0 : index
    %0 = vector.load %arg1[%c0, %c0_0, %c0_1] : memref<2x8x32xf32, #tpu.memory_space<vmem>>, vector<2x8x32xf32>
    %1 = vector.shape_cast %0 : vector<2x8x32xf32> to vector<16x32xf32>
    %c0_2 = arith.constant 0 : index
    %c0_3 = arith.constant 0 : index
    %2 = vector.load %arg2[%c0_2, %c0_3] : memref<32x16xf32, #tpu.memory_space<vmem>>, vector<32x16xf32>
    %cst = arith.constant dense<0.000000e+00> : vector<16x16xf32>
    %3 = tpu.matmul %1, %2, %cst {dimension_numbers = #tpu.dot_dimension_numbers<[1], [0], [0], [1], [0, 0, 1, 1], [], []>} : vector<16x32xf32>, vector<32x16xf32>, vector<16x16xf32> -> vector<16x16xf32>
    %c0_4 = arith.constant 0 : index
    %c0_5 = arith.constant 0 : index
    %4 = vector.load %arg3[%c0_4, %c0_5] : memref<1x16xf32, #tpu.memory_space<vmem>>, vector<1x16xf32>
    %5 = vector.broadcast %4 : vector<1x16xf32> to vector<16x16xf32>
    %6 = arith.addf %3, %5 : vector<16x16xf32>
    %7 = math.tanh %6 : vector<16x16xf32>
    %c0_6 = arith.constant 0 : index
    %c0_7 = arith.constant 0 : index
    %8 = vector.load %arg4[%c0_6, %c0_7] : memref<16x1xf32, #tpu.memory_space<vmem>>, vector<16x1xf32>
    %cst_8 = arith.constant dense<0.000000e+00> : vector<16x1xf32>
    %9 = tpu.matmul %7, %8, %cst_8 {dimension_numbers = #tpu.dot_dimension_numbers<[1], [0], [0], [1], [0, 0, 1, 1], [], []>} : vector<16x16xf32>, vector<16x1xf32>, vector<16x1xf32> -> vector<16x1xf32>
    %10 = vector.shape_cast %9 : vector<16x1xf32> to vector<2x8xf32>
    %cst_9 = arith.constant dense<0xFF800000> : vector<2xf32>
    %11 = vector.multi_reduction <maximumf>, %10, %cst_9 [1] : vector<2x8xf32> to vector<2xf32>
    %12 = vector.shape_cast %11 : vector<2xf32> to vector<2x1xf32>
    %13 = vector.broadcast %12 : vector<2x1xf32> to vector<2x8xf32>
    %14 = arith.subf %10, %13 : vector<2x8xf32>
    %15 = math.exp %14 : vector<2x8xf32>
    %cst_10 = arith.constant dense<0.000000e+00> : vector<2xf32>
    %16 = vector.multi_reduction <add>, %15, %cst_10 [1] : vector<2x8xf32> to vector<2xf32>
    %17 = vector.shape_cast %16 : vector<2xf32> to vector<2x1xf32>
    %18 = vector.shape_cast %15 : vector<2x8xf32> to vector<2x1x8xf32>
    "tpu.trace_start"() <{level = 10 : i32, message = "bqs,bsd->bqd"}> : () -> ()
    %cst_11 = arith.constant dense<0.000000e+00> : vector<2x1x32xf32>
    %19 = tpu.matmul %18, %0, %cst_11 {dimension_numbers = #tpu.dot_dimension_numbers<[2], [1], [1], [2], [0, 0, 0, 1, 1, 2], [0], [0]>} : vector<2x1x8xf32>, vector<2x8x32xf32>, vector<2x1x32xf32> -> vector<2x1x32xf32>
    "tpu.trace_stop"() : () -> ()
    %20 = vector.shape_cast %19 : vector<2x1x32xf32> to vector<2x32xf32>
    %21 = tpu.reciprocal %17 {approx = true} : vector<2x1xf32> -> vector<2x1xf32>
    %22 = vector.broadcast %21 : vector<2x1xf32> to vector<2x32xf32>
    %23 = arith.mulf %20, %22 : vector<2x32xf32>
    %c0_12 = arith.constant 0 : index
    %c0_13 = arith.constant 0 : index
    %24 = vector.load %arg5[%c0_12, %c0_13] : memref<2x32xf32, #tpu.memory_space<vmem>>, vector<2x32xf32>
    tpu.vector_store %arg5[%c0_12, %c0_13], %23 {strides = array<i32>} : memref<2x32xf32, #tpu.memory_space<vmem>>, vector<2x32xf32>,
    return
  }
  func.func @transform_0(%arg0: i32) -> (i32, i32, i32) {
    %c0_i32 = arith.constant 0 : i32
    %c0_i32_0 = arith.constant 0 : i32
    %c0_i32_1 = arith.constant 0 : i32
    return %arg0, %c0_i32, %c0_i32_0 : i32, i32, i32
  }
  func.func @transform_1(%arg0: i32) -> (i32, i32) {
    %c0_i32 = arith.constant 0 : i32
    %c0_i32_0 = arith.constant 0 : i32
    %c0_i32_1 = arith.constant 0 : i32
    return %c0_i32, %c0_i32_0 : i32, i32
  }
  func.func @transform_2(%arg0: i32) -> (i32, i32) {
    %c0_i32 = arith.constant 0 : i32
    %c0_i32_0 = arith.constant 0 : i32
    %c0_i32_1 = arith.constant 0 : i32
    return %c0_i32, %c0_i32_0 : i32, i32
  }
  func.func @transform_3(%arg0: i32) -> (i32, i32) {
    %c0_i32 = arith.constant 0 : i32
    %c0_i32_0 = arith.constant 0 : i32
    %c0_i32_1 = arith.constant 0 : i32
    return %c0_i32, %c0_i32_0 : i32, i32
  }
  func.func @transform_4(%arg0: i32) -> (i32, i32) {
    %c0_i32 = arith.constant 0 : i32
    %c0_i32_0 = arith.constant 0 : i32
    return %arg0, %c0_i32 : i32, i32
  }
}

</mosaic_0001>

<llo_original>
// kernel: tpu_custom_call.1
$region0: #{tpu_custom_call.1}
  #allocation0 [shape = 'u32[]', space=smem, size = 0x4, offset = 0x4, fixed_abs, tag = 'smem constant byte address 0x4 - core index']
  #allocation1 [shape = 'u32[144,128]{1,0:T(1,128)}', space=vmem, size = 0x12000, scoped, tag = 'internal scratch']
  %s0 = inlined_call_operand.vmem [shape: f32[2,8,32], index: 0, kind: input, shape index: {}]
  %s1 = inlined_call_operand.vmem [shape: f32[32,16], index: 1, kind: input, shape index: {}]
  %s2 = inlined_call_operand.vmem [shape: f32[1,16], index: 2, kind: input, shape index: {}]
  %s3 = inlined_call_operand.vmem [shape: f32[16,1], index: 3, kind: input, shape index: {}]
  %s4 = inlined_call_operand.hbm [shape: f32[2,32], index: 4, kind: output, shape index: {}]
  %s5 = sld [smem:[#allocation0]]
  $region26: #{tpu_custom_call.1} parent=0
    _
  %s7 = ssub.s32 1, %s5
  %s8 = scalar_select 0, %s7, %s5
  $region1: #{tpu_custom_call.1} parent=0
    #allocation2 [shape = 'u8[1024]{0}', space=vmem, size = 0x400, scoped, tag = 'output window, operand 0, single buffered']
    #allocation3 [shape = 's32[1]{0}', space=sflag, size = 0x4, scoped, tag = 'scoped memory for tpu_custom_call.1']
    %9 = vsyncpa [#allocation3], 0
    // Predicated region
    $region2: #{tpu_custom_call.1} parent=1 // pred_check
      _
    $region3: #{tpu_custom_call.1} parent=1 // pred_check_branch
      %11 = sbr.rel (0) target = $region5
    $region4: #{tpu_custom_call.1} parent=1 // pred_region
      _
    $region5: #{tpu_custom_call.1} parent=1 // pred_fallthru
      _
    // Predicated region
    $region6: #{tpu_custom_call.1} parent=1 // pred_check
      _
    $region7: #{tpu_custom_call.1} parent=1 // pred_check_branch
      %13 = sbr.rel (0) target = $region9
    $region8: #{tpu_custom_call.1} parent=1 // pred_region
      _
    $region9: #{tpu_custom_call.1} parent=1 // pred_fallthru
      _
    // Predicated region
    $region10: #{tpu_custom_call.1} parent=1 // pred_check
      _
    $region11: #{tpu_custom_call.1} parent=1 // pred_check_branch
      %15 = sbr.rel (0) target = $region13
    $region12: #{tpu_custom_call.1} parent=1 // pred_region
      _
    $region13: #{tpu_custom_call.1} parent=1 // pred_fallthru
      _
    // Predicated region
    $region14: #{tpu_custom_call.1} parent=1 // pred_check
      _
    $region15: #{tpu_custom_call.1} parent=1 // pred_check_branch
      %17 = sbr.rel (0) target = $region17
    $region16: #{tpu_custom_call.1} parent=1 // pred_region
      _
    $region17: #{tpu_custom_call.1} parent=1 // pred_fallthru
      _
    %v18 = vld [vmem:[%s0] sm:$0xff]
    %v19 = vld [vmem:[%s0 + $0x8] sm:$0xff]
    %v20 = vld [vmem:[%s1] sm:$0xff]
    %v21 = vld [vmem:[%s1 + $0x8] sm:$0xff]
    %v22 = vld [vmem:[%s1 + $0x10] sm:$0xff]
    %v23 = vld [vmem:[%s1 + $0x18] sm:$0xff]
    %v24 = vld [vmem:[%s2] sm:$0x1]
    %v26 = vlaneseq
    %v27 = vshrl.u32 %v26, 7
    %v28 = vsub.s32 0, %v27
    %v29 = vrot.slane %v24, %v28
    %vm31 = vcmask 261120
    %v33 = vsel %vm31, %v18, 0
    %v36 = vsel %vm31, %v19, 0
    %38 = vmatprep.subr.mxu0 0.0
    %39 = vmatpush1.msra.mxu0 %v20
    %40 = vmatprep.subr.mxu0 0.0
    %41 = vmatpush1.msra.mxu0 %v21
    %42 = vmatprep.subr.mxu0 0.0
    %43 = vmatpush1.msra.mxu0 %v22
    %44 = vmatprep.subr.mxu0 0.0
    %45 = vmatpush1.msra.mxu0 %v23
    %46 = vmatprep.subr.mxu0 0.0
    %47 = vmatpush1.msra.mxu0 0.0
    %48 = vmatprep.subr.mxu0 0.0
    %49 = vmatpush1.msra.mxu0 0.0
    %50 = vmatprep.subr.mxu0 0.0
    %51 = vmatpush1.msra.mxu0 0.0
    %52 = vmatprep.subr.mxu0 0.0
    %53 = vmatpush1.msra.mxu0 0.0
    %54 = vmatprep.subr.mxu0 0.0
    %55 = vmatpush1.msra.mxu0 0.0
    %56 = vmatprep.subr.mxu0 0.0
    %57 = vmatpush1.msra.mxu0 0.0
    %58 = vmatprep.subr.mxu0 0.0
    %59 = vmatpush1.msra.mxu0 0.0
    %60 = vmatprep.subr.mxu0 0.0
    %61 = vmatpush1.msra.mxu0 0.0
    %62 = vmatprep.subr.mxu0 0.0
    %63 = vmatpush1.msra.mxu0 0.0
    %64 = vmatprep.subr.mxu0 0.0
    %65 = vmatpush1.msra.mxu0 0.0
    %66 = vmatprep.subr.mxu0 0.0
    %67 = vmatpush1.msra.mxu0 0.0
    %68 = vmatprep.subr.mxu0 0.0
    %69 = vmatpush1.msra.mxu0 0.0
    %70 = vmatprep.subr.mxu0 0.0
    %71 = vmatpush1.msra.mxu0 0.0
    %72 = vmatprep.subr.mxu0 0.0
    %73 = vmatpush1.msra.mxu0 0.0
    %74 = vmatprep.subr.mxu0 0.0
    %75 = vmatpush1.msra.mxu0 0.0
    %76 = vmatprep.subr.mxu0 0.0
    %77 = vmatpush1.msra.mxu0 0.0
    %78 = vmatprep.subr.mxu0 0.0
    %79 = vmatpush1.msra.mxu0 0.0
    %80 = vmatprep.subr.mxu0 0.0
    %81 = vmatpush1.msra.mxu0 0.0
    %82 = vmatprep.subr.mxu0 0.0
    %83 = vmatpush1.msra.mxu0 0.0
    %84 = vmatprep.subr.mxu0 0.0
    %85 = vmatpush1.msra.mxu0 0.0
    %86 = vmatprep.subr.mxu0 0.0
    %87 = vmatpush1.msra.mxu0 0.0
    %88 = vmatprep.subr.mxu0 0.0
    %89 = vmatpush1.msra.mxu0 0.0
    %90 = vmatprep.subr.mxu0 0.0
    %91 = vmatpush1.msra.mxu0 0.0
    %92 = vmatprep.subr.mxu0 0.0
    %93 = vmatpush1.msra.mxu0 0.0
    %94 = vmatprep.subr.mxu0 0.0
    %95 = vmatpush1.msra.mxu0 0.0
    %96 = vmatprep.subr.mxu0 0.0
    %97 = vmatpush1.msra.mxu0 0.0
    %98 = vmatprep.subr.mxu0 0.0
    %99 = vmatpush1.msra.mxu0 0.0
    %100 = vmatprep.subr.mxu0 0.0
    %101 = vmatpush1.msra.mxu0 0.0
    %102 = vmatprep.mubr.f32.mxu0 0.0
    %103 = vmatmul.mubr.f32.gmra.mrb[0].mxu0 %v33
    %v104 = vpop.f32.mrb[0].mxu0
    %v105 = vadd.f32 %v29, %v104
    %v106 = vpop.f32.mrb[0].mxu0
    %107 = vmatprep.mubr.f32.mxu0 0.0
    %108 = vmatmul.mubr.f32.gmra.mrb[0].mxu0 %v36
    %v109 = vpop.f32.mrb[0].mxu0
    %v110 = vadd.f32 %v29, %v109
    %v111 = vpop.f32.mrb[0].mxu0
    %112 = vdwg.mxu0
    %v113 = vtanh.pop %v105
    %v114 = vtanh.pop %v110
    %v115 = vld [vmem:[%s3] sm:$0xff]
    %v116 = vld [vmem:[%s3 + $0x8] sm:$0xff]
    %vm117 = vcmask 130048
    %v119 = vsel %vm117, %v113, 0
    %v122 = vsel %vm117, %v114, 0
    %124 = vmatprep.subr.mxu0 0.0
    %125 = vmatpush1.msra.mxu0 %v115
    %126 = vmatprep.subr.mxu0 0.0
    %127 = vmatpush1.msra.mxu0 %v116
    %128 = vmatprep.subr.mxu0 0.0
    %129 = vmatpush1.msra.mxu0 0.0
    %130 = vmatprep.subr.mxu0 0.0
    %131 = vmatpush1.msra.mxu0 0.0
    %132 = vmatprep.subr.mxu0 0.0
    %133 = vmatpush1.msra.mxu0 0.0
    %134 = vmatprep.subr.mxu0 0.0
    %135 = vmatpush1.msra.mxu0 0.0
    %136 = vmatprep.subr.mxu0 0.0
    %137 = vmatpush1.msra.mxu0 0.0
    %138 = vmatprep.subr.mxu0 0.0
    %139 = vmatpush1.msra.mxu0 0.0
    %140 = vmatprep.subr.mxu0 0.0
    %141 = vmatpush1.msra.mxu0 0.0
    %142 = vmatprep.subr.mxu0 0.0
    %143 = vmatpush1.msra.mxu0 0.0
    %144 = vmatprep.subr.mxu0 0.0
    %145 = vmatpush1.msra.mxu0 0.0
    %146 = vmatprep.subr.mxu0 0.0
    %147 = vmatpush1.msra.mxu0 0.0
    %148 = vmatprep.subr.mxu0 0.0
    %149 = vmatpush1.msra.mxu0 0.0
    %150 = vmatprep.subr.mxu0 0.0
    %151 = vmatpush1.msra.mxu0 0.0
    %152 = vmatprep.subr.mxu0 0.0
    %153 = vmatpush1.msra.mxu0 0.0
    %154 = vmatprep.subr.mxu0 0.0
    %155 = vmatpush1.msra.mxu0 0.0
    %156 = vmatprep.subr.mxu0 0.0
    %157 = vmatpush1.msra.mxu0 0.0
    %158 = vmatprep.subr.mxu0 0.0
    %159 = vmatpush1.msra.mxu0 0.0
    %160 = vmatprep.subr.mxu0 0.0
    %161 = vmatpush1.msra.mxu0 0.0
    %162 = vmatprep.subr.mxu0 0.0
    %163 = vmatpush1.msra.mxu0 0.0
    %164 = vmatprep.subr.mxu0 0.0
    %165 = vmatpush1.msra.mxu0 0.0
    %166 = vmatprep.subr.mxu0 0.0
    %167 = vmatpush1.msra.mxu0 0.0
    %168 = vmatprep.subr.mxu0 0.0
    %169 = vmatpush1.msra.mxu0 0.0
    %170 = vmatprep.subr.mxu0 0.0
    %171 = vmatpush1.msra.mxu0 0.0
    %172 = vmatprep.subr.mxu0 0.0
    %173 = vmatpush1.msra.mxu0 0.0
    %174 = vmatprep.subr.mxu0 0.0
    %175 = vmatpush1.msra.mxu0 0.0
    %176 = vmatprep.subr.mxu0 0.0
    %177 = vmatpush1.msra.mxu0 0.0
    %178 = vmatprep.subr.mxu0 0.0
    %179 = vmatpush1.msra.mxu0 0.0
    %180 = vmatprep.subr.mxu0 0.0
    %181 = vmatpush1.msra.mxu0 0.0
    %182 = vmatprep.subr.mxu0 0.0
    %183 = vmatpush1.msra.mxu0 0.0
    %184 = vmatprep.subr.mxu0 0.0
    %185 = vmatpush1.msra.mxu0 0.0
    %186 = vmatprep.subr.mxu0 0.0
    %187 = vmatpush1.msra.mxu0 0.0
    %188 = vmatprep.mubr.f32.mxu0 0.0
    %189 = vmatmul.mubr.f32.gmra.mrb[0].mxu0 %v119
    %v190 = vpop.f32.mrb[0].mxu0
    %v191 = vadd.f32 0.0, %v190
    %v192 = vpop.f32.mrb[0].mxu0
    %193 = vmatprep.mubr.f32.mxu0 0.0
    %194 = vmatmul.mubr.f32.gmra.mrb[0].mxu0 %v122
    %v195 = vpop.f32.mrb[0].mxu0
    %v196 = vadd.f32 0.0, %v195
    %v197 = vpop.f32.mrb[0].mxu0
    %198 = vdwg.mxu0
    %201 = vset.pattern.permute.xlu0 0
    %202 = vperm.xlu0 %201, %v191
    %v203 = vpop.permute.xlu0 %202
    %204 = vset.pattern.permute.xlu0 0
    %205 = vperm.xlu0 %204, %v196
    %v206 = vpop.permute.xlu0 %205
    %v207 = vlaneseq
    %v208 = vand.u32 %v207, 127
    %v209 = vlaneseq
    %v210 = vshrl.u32 %v209, 7
    %v211 = vsub.s32 %v208, %v210
    %v212 = vrot.slane %v203, %v211
    %v213 = vlaneseq
    %v214 = vshrl.u32 %v213, 7
    %v215 = vsub.s32 %v208, %v214
    %v216 = vrot.slane %v206, %v215
    %vm217 = vcmask 1041409
    %v218 = vsel %vm217, %v216, %v212
    %vm220 = vcmask 58368
    %v221 = vsel %vm220, %v218, -inf
    %222 = vmax.xlane.f32.xlu0 %v221
    %v223 = vpop.xlane.xlu0 %222
    %v225 = vlaneseq
    %v226 = vshrl.u32 %v225, 7
    %v227 = vsub.s32 0, %v226
    %v228 = vrot.slane %v223, %v227
    %v229 = vlaneseq
    %v230 = vshrl.u32 %v229, 7
    %v231 = vsub.s32 1, %v230
    %v232 = vrot.slane %v223, %v231
    %v235 = vsub.f32 %v191, %v228
    %v236 = vsub.f32 %v196, %v232
    %v237 = vmul.f32 %v235, 1.442695
    %v238 = vpow.pop %v237
    %v239 = vmul.f32 %v236, 1.442695
    %v240 = vpow.pop %v239
    %243 = vset.pattern.permute.xlu0 0
    %244 = vperm.xlu0 %243, %v238
    %v245 = vpop.permute.xlu0 %244
    %246 = vset.pattern.permute.xlu0 0
    %247 = vperm.xlu0 %246, %v240
    %v248 = vpop.permute.xlu0 %247
    %v249 = vlaneseq
    %v250 = vshrl.u32 %v249, 7
    %v251 = vsub.s32 %v208, %v250
    %v252 = vrot.slane %v245, %v251
    %v253 = vlaneseq
    %v254 = vshrl.u32 %v253, 7
    %v255 = vsub.s32 %v208, %v254
    %v256 = vrot.slane %v248, %v255
    %v257 = vsel %vm217, %v256, %v252
    %v259 = vsel %vm220, %v257, 0.0
    %260 = vadd.xlane.f32.xlu0 %v259
    %v261 = vpop.xlane.xlu0 %260
    %vm262 = vcmask 64512
    %v263 = vsel %vm262, %v252, 0
    %265 = vmatprep.subr.mxu0 0.0
    %266 = vmatpush1.msra.mxu0 %v18
    %267 = vmatprep.subr.mxu0 0.0
    %268 = vmatpush1.msra.mxu0 0.0
    %269 = vmatprep.subr.mxu0 0.0
    %270 = vmatpush1.msra.mxu0 0.0
    %271 = vmatprep.subr.mxu0 0.0
    %272 = vmatpush1.msra.mxu0 0.0
    %273 = vmatprep.subr.mxu0 0.0
    %274 = vmatpush1.msra.mxu0 0.0
    %275 = vmatprep.subr.mxu0 0.0
    %276 = vmatpush1.msra.mxu0 0.0
    %277 = vmatprep.subr.mxu0 0.0
    %278 = vmatpush1.msra.mxu0 0.0
    %279 = vmatprep.subr.mxu0 0.0
    %280 = vmatpush1.msra.mxu0 0.0
    %281 = vmatprep.subr.mxu0 0.0
    %282 = vmatpush1.msra.mxu0 0.0
    %283 = vmatprep.subr.mxu0 0.0
    %284 = vmatpush1.msra.mxu0 0.0
    %285 = vmatprep.subr.mxu0 0.0
    %286 = vmatpush1.msra.mxu0 0.0
    %287 = vmatprep.subr.mxu0 0.0
    %288 = vmatpush1.msra.mxu0 0.0
    %289 = vmatprep.subr.mxu0 0.0
    %290 = vmatpush1.msra.mxu0 0.0
    %291 = vmatprep.subr.mxu0 0.0
    %292 = vmatpush1.msra.mxu0 0.0
    %293 = vmatprep.subr.mxu0 0.0
    %294 = vmatpush1.msra.mxu0 0.0
    %295 = vmatprep.subr.mxu0 0.0
    %296 = vmatpush1.msra.mxu0 0.0
    %297 = vmatprep.subr.mxu0 0.0
    %298 = vmatpush1.msra.mxu0 0.0
    %299 = vmatprep.subr.mxu0 0.0
    %300 = vmatpush1.msra.mxu0 0.0
    %301 = vmatprep.subr.mxu0 0.0
    %302 = vmatpush1.msra.mxu0 0.0
    %303 = vmatprep.subr.mxu0 0.0
    %304 = vmatpush1.msra.mxu0 0.0
    %305 = vmatprep.subr.mxu0 0.0
    %306 = vmatpush1.msra.mxu0 0.0
    %307 = vmatprep.subr.mxu0 0.0
    %308 = vmatpush1.msra.mxu0 0.0
    %309 = vmatprep.subr.mxu0 0.0
    %310 = vmatpush1.msra.mxu0 0.0
    %311 = vmatprep.subr.mxu0 0.0
    %312 = vmatpush1.msra.mxu0 0.0
    %313 = vmatprep.subr.mxu0 0.0
    %314 = vmatpush1.msra.mxu0 0.0
    %315 = vmatprep.subr.mxu0 0.0
    %316 = vmatpush1.msra.mxu0 0.0
    %317 = vmatprep.subr.mxu0 0.0
    %318 = vmatpush1.msra.mxu0 0.0
    %319 = vmatprep.subr.mxu0 0.0
    %320 = vmatpush1.msra.mxu0 0.0
    %321 = vmatprep.subr.mxu0 0.0
    %322 = vmatpush1.msra.mxu0 0.0
    %323 = vmatprep.subr.mxu0 0.0
    %324 = vmatpush1.msra.mxu0 0.0
    %325 = vmatprep.subr.mxu0 0.0
    %326 = vmatpush1.msra.mxu0 0.0
    %327 = vmatprep.subr.mxu0 0.0
    %328 = vmatpush1.msra.mxu0 0.0
    %329 = vmatprep.mubr.f32.mxu0 0.0
    %330 = vmatmul.mubr.f32.gmra.mrb[0].mxu0 %v263
    %v331 = vpop.f32.mrb[0].mxu0
    %v332 = vadd.f32 0.0, %v331
    %v333 = vpop.f32.mrb[0].mxu0
    %334 = vdwg.mxu0
    %v335 = vsel %vm262, %v256, 0
    %337 = vmatprep.subr.mxu0 0.0
    %338 = vmatpush1.msra.mxu0 %v19
    %339 = vmatprep.subr.mxu0 0.0
    %340 = vmatpush1.msra.mxu0 0.0
    %341 = vmatprep.subr.mxu0 0.0
    %342 = vmatpush1.msra.mxu0 0.0
    %343 = vmatprep.subr.mxu0 0.0
    %344 = vmatpush1.msra.mxu0 0.0
    %345 = vmatprep.subr.mxu0 0.0
    %346 = vmatpush1.msra.mxu0 0.0
    %347 = vmatprep.subr.mxu0 0.0
    %348 = vmatpush1.msra.mxu0 0.0
    %349 = vmatprep.subr.mxu0 0.0
    %350 = vmatpush1.msra.mxu0 0.0
    %351 = vmatprep.subr.mxu0 0.0
    %352 = vmatpush1.msra.mxu0 0.0
    %353 = vmatprep.subr.mxu0 0.0
    %354 = vmatpush1.msra.mxu0 0.0
    %355 = vmatprep.subr.mxu0 0.0
    %356 = vmatpush1.msra.mxu0 0.0
    %357 = vmatprep.subr.mxu0 0.0
    %358 = vmatpush1.msra.mxu0 0.0
    %359 = vmatprep.subr.mxu0 0.0
    %360 = vmatpush1.msra.mxu0 0.0
    %361 = vmatprep.subr.mxu0 0.0
    %362 = vmatpush1.msra.mxu0 0.0
    %363 = vmatprep.subr.mxu0 0.0
    %364 = vmatpush1.msra.mxu0 0.0
    %365 = vmatprep.subr.mxu0 0.0
    %366 = vmatpush1.msra.mxu0 0.0
    %367 = vmatprep.subr.mxu0 0.0
    %368 = vmatpush1.msra.mxu0 0.0
    %369 = vmatprep.subr.mxu0 0.0
    %370 = vmatpush1.msra.mxu0 0.0
    %371 = vmatprep.subr.mxu0 0.0
    %372 = vmatpush1.msra.mxu0 0.0
    %373 = vmatprep.subr.mxu0 0.0
    %374 = vmatpush1.msra.mxu0 0.0
    %375 = vmatprep.subr.mxu0 0.0
    %376 = vmatpush1.msra.mxu0 0.0
    %377 = vmatprep.subr.mxu0 0.0
    %378 = vmatpush1.msra.mxu0 0.0
    %379 = vmatprep.subr.mxu0 0.0
    %380 = vmatpush1.msra.mxu0 0.0
    %381 = vmatprep.subr.mxu0 0.0
    %382 = vmatpush1.msra.mxu0 0.0
    %383 = vmatprep.subr.mxu0 0.0
    %384 = vmatpush1.msra.mxu0 0.0
    %385 = vmatprep.subr.mxu0 0.0
    %386 = vmatpush1.msra.mxu0 0.0
    %387 = vmatprep.subr.mxu0 0.0
    %388 = vmatpush1.msra.mxu0 0.0
    %389 = vmatprep.subr.mxu0 0.0
    %390 = vmatpush1.msra.mxu0 0.0
    %391 = vmatprep.subr.mxu0 0.0
    %392 = vmatpush1.msra.mxu0 0.0
    %393 = vmatprep.subr.mxu0 0.0
    %394 = vmatpush1.msra.mxu0 0.0
    %395 = vmatprep.subr.mxu0 0.0
    %396 = vmatpush1.msra.mxu0 0.0
    %397 = vmatprep.subr.mxu0 0.0
    %398 = vmatpush1.msra.mxu0 0.0
    %399 = vmatprep.subr.mxu0 0.0
    %400 = vmatpush1.msra.mxu0 0.0
    %401 = vmatprep.mubr.f32.mxu0 0.0
    %402 = vmatmul.mubr.f32.gmra.mrb[0].mxu0 %v335
    %v403 = vpop.f32.mrb[0].mxu0
    %v404 = vadd.f32 0.0, %v403
    %v405 = vpop.f32.mrb[0].mxu0
    %406 = vdwg.mxu0
    %v407 = vrcp.pop %v261
    %v409 = vrot.slane %v407, 1
    %v412 = vmul.f32 %v332, %v407
    %v413 = vmul.f32 %v404, %v409
    %v416 = vrot.slane %v413, 7
    %v417 = vsel %vm217, %v416, %v412
    %vm419 = vcmask 254976
    %420 = vst.msk [vmem:[#allocation2] sm:$0x3] %vm419, %v417
    // Predicated region
    $region18: #{tpu_custom_call.1} parent=1 // pred_check
      _
    $region19: #{tpu_custom_call.1} parent=1 // pred_check_branch
      %422 = sbr.rel (0) target = $region21
    $region20: #{tpu_custom_call.1} parent=1 // pred_region
      %s424 = ssub.s32 32, 32
      %425 = vsyncadd [#allocation3], %s424
      %s427 = sshll.u32 [#allocation2], 4
      %s428 = int_to_ptr.vmem [resolvable:$true] %s427
      %430 = dma.vmem_to_hbm [thread:$0]  %s428, 32, %s4, [#allocation3]
    $region21: #{tpu_custom_call.1} parent=1 // pred_fallthru
      _
    // Predicated region
    $region22: #{tpu_custom_call.1} parent=1 // pred_check
      _
    $region23: #{tpu_custom_call.1} parent=1 // pred_check_branch
      %432 = sbr.rel (0) target = $region25
    $region24: #{tpu_custom_call.1} parent=1 // pred_region
      %433 = dma.done [#allocation3], 32
    $region25: #{tpu_custom_call.1} parent=1 // pred_fallthru
      _
    %434 = vsyncpa [#allocation3], 1

</llo_original>
